<compile_context>
chip_gen: v5e
topology: v5e:2x2
jax: 0.10.0
libtpu: 0.0.40
codegen_flags: <defaults>
</compile_context>

<pallas_src>
import jax
import jax.numpy as jnp
from jax import lax
from jax.experimental import pallas as pl
from jax.experimental.pallas import tpu as pltpu


def _round_up(x, m):
    return ((x + m - 1) // m) * m


# ------------------------------- kernels ------------------------------------

def _single_block_kernel(x_ref, wt_ref, b_ref, o_ref):
    # Whole problem resident in VMEM: one MXU dot + bias add, zero grid/step
    # overhead.  wt is already (D, N), so no transpose anywhere.
    acc = jnp.dot(x_ref[...], wt_ref[...], preferred_element_type=jnp.float32)
    o_ref[...] = (acc + b_ref[...]).astype(o_ref.dtype)


def _tiled_kernel(x_ref, wt_ref, b_ref, o_ref, acc_ref):
    # grid = (Mp//tm, Np//tn, Dp//tk); reduction axis (k) last.
    # f32 accumulator lives in VMEM scratch; bias is folded into the k==0 init
    # (no separate epilogue read-modify-write); output is written once, already
    # in the caller's dtype.
    k = pl.program_id(2)

    @pl.when(k == 0)
    def _():
        acc_ref[...] = jnp.broadcast_to(b_ref[...], acc_ref.shape).astype(jnp.float32)

    acc_ref[...] += jnp.dot(x_ref[...], wt_ref[...],
                            preferred_element_type=jnp.float32)

    @pl.when(k == pl.num_programs(2) - 1)
    def _():
        o_ref[...] = acc_ref[...].astype(o_ref.dtype)


# ------------------------------- module -------------------------------------

class HashedFCPallas:
    """Forward path of HashedFC (an nn.Linear) as a Pallas TPU kernel.

    weight: (N, D)  -- PyTorch nn.Linear layout
    bias:   (N,)
    All weight layout / padding / dtype work happens once here, not per call.
    """

    def __init__(self, weight, bias, *, compute_dtype=None,
                 single_block_max_bytes=2 << 20):
        N, D = weight.shape
        assert bias.shape == (N,)
        self.N, self.D = N, D
        dt = jnp.dtype(compute_dtype) if compute_dtype is not None else jnp.dtype(weight.dtype)
        self.compute_dtype = dt
        self.single_block_max_bytes = single_block_max_bytes
        isz = dt.itemsize

        # Tile caps: large tiles for narrow dtypes (higher arithmetic intensity,
        # ~10 MiB double-buffered working set), moderate tiles for f32.
        if isz <= 2:
            self._TM, TN, TK = 512, 1024, 512
        else:
            self._TM, TN, TK = 256, 512, 512

        # >= 2 N-blocks whenever N spans more than one 128-lane group, so the
        # "parallel" N axis can be sharded across both v7x TensorCores.
        n128 = pl.cdiv(N, 128)
        self.tn = min(TN, 128 * max(1, -(-n128 // 2)))
        self.tk = min(TK, _round_up(D, 128))
        self.Np = _round_up(N, self.tn)
        self.Dp = _round_up(D, self.tk)

        # One-time weight prep: (N, D) -> (Dp, Np), compute dtype, zero-padded.
        wt = weight.astype(dt).T
        self.wt = jnp.pad(wt, ((0, self.Dp - D), (0, self.Np - N)))
        # Bias stays f32 (tiny); it is consumed by the f32 accumulator.
        self.b = jnp.pad(bias.astype(jnp.float32),
                         (0, self.Np - N)).reshape(1, self.Np)

    def __call__(self, x):
        out_dtype = x.dtype
        lead = x.shape[:-1]
        assert x.shape[-1] == self.D
        N, D, Np, Dp, tn, tk = self.N, self.D, self.Np, self.Dp, self.tn, self.tk

        x2 = x.reshape(-1, D).astype(self.compute_dtype)
        M = x2.shape[0]
        isz = self.compute_dtype.itemsize
        osz = jnp.dtype(out_dtype).itemsize

        # ---- single-block fast path (tiny layers) --------------------------
        total_bytes = isz * (M * Dp + Dp * Np) + 4 * Np + osz * M * Np
        if total_bytes <= self.single_block_max_bytes:
            if Dp != D:
                x2 = jnp.pad(x2, ((0, 0), (0, Dp - D)))
            out = pl.pallas_call(
                _single_block_kernel,
                out_shape=jax.ShapeDtypeStruct((M, Np), out_dtype),
            )(x2, self.wt, self.b)
            return out[:, :N].reshape(*lead, N)

        # ---- tiled path -----------------------------------------------------
        tm = min(self._TM, _round_up(M, 8))
        Mp = _round_up(M, tm)
        if (Mp, Dp) != (M, D):
            x2 = jnp.pad(x2, ((0, Mp - M), (0, Dp - D)))

        grid = (Mp // tm, Np // tn, Dp // tk)

        # Double-buffered inputs + output + f32 scratch; cap at 48 MiB so the
        # same config is safe on v7x's 64 MiB VMEM.
        ws = (2 * isz * (tm * tk + tk * tn) + 2 * osz * tm * tn
              + 4 * tm * tn + 2 * 4 * tn)
        vmem_limit = int(min(48 << 20, max(32 << 20, 2 * ws)))

        cost = pl.CostEstimate(
            flops=2 * M * N * D,
            transcendentals=0,
            bytes_accessed=isz * (M * D + D * N) + 4 * N + osz * M * N,
        )

        out = pl.pallas_call(
            _tiled_kernel,
            out_shape=jax.ShapeDtypeStruct((Mp, Np), out_dtype),
            grid_spec=pltpu.PrefetchScalarGridSpec(
                num_scalar_prefetch=0,
                grid=grid,
                in_specs=[
                    pl.BlockSpec((tm, tk), lambda i, j, k: (i, k)),   # x tile
                    pl.BlockSpec((tk, tn), lambda i, j, k: (k, j)),   # W^T tile (D, N)
                    pl.BlockSpec((1, tn), lambda i, j, k: (0, j)),    # bias tile
                ],
                out_specs=pl.BlockSpec((tm, tn), lambda i, j, k: (i, j)),
                scratch_shapes=[pltpu.VMEM((tm, tn), jnp.float32)],
            ),
            compiler_params=pltpu.CompilerParams(
                dimension_semantics=("parallel", "parallel", "arbitrary"),
                vmem_limit_bytes=vmem_limit,
            ),
            cost_estimate=cost,
        )(x2, self.wt, self.b)

        return out[:M, :N].reshape(*lead, N)


# ------------------------------- tests ---------------------------------------

if __name__ == "__main__":
    key = jax.random.PRNGKey(0)
    kx1, kw1, kx2, kw2, kb2, kx3, kw3, kb3 = jax.random.split(key, 8)
    initrange = 0.05  # HashedFC.init_weights: weight ~ U(-0.05, 0.05), bias = 0

    # --- 1) small layer, faithful to HashedFC(256, 128, K): single-block path
    batch, input_dim, output_dim = 8, 256, 128
    w1 = jax.random.uniform(kw1, (output_dim, input_dim), jnp.float32,
                            -initrange, initrange)
    b1 = jnp.zeros((output_dim,), jnp.float32)
    x1 = jax.random.normal(kx1, (batch, input_dim), jnp.float32)

    layer1 = HashedFCPallas(w1, b1)
    y1 = jax.block_until_ready(layer1(x1))
    y1_ref = jnp.dot(x1, w1.T, precision=lax.Precision.HIGHEST) + b1
    assert y1.shape == (batch, output_dim)
    assert jnp.allclose(y1, y1_ref, atol=1e-3, rtol=1e-3)

    # --- 2) ragged dims, bf16 compute, forced through the tiled path --------
    M2, D2, N2 = 50, 300, 130
    w2 = jax.random.uniform(kw2, (N2, D2), jnp.float32, -initrange, initrange)
    b2 = 0.01 * jax.random.normal(kb2, (N2,), jnp.float32)
    x2 = jax.random.normal(kx2, (M2, D2), jnp.float32)

    layer2 = HashedFCPallas(w2, b2, compute_dtype=jnp.bfloat16,
                            single_block_max_bytes=0)
    y2 = jax.block_until_ready(layer2(x2))
    x2r = x2.astype(jnp.bfloat16).astype(jnp.float32)
    w2r = w2.astype(jnp.bfloat16).astype(jnp.float32)
    y2_ref = jnp.dot(x2r, w2r.T, precision=lax.Precision.HIGHEST) + b2
    assert y2.shape == (M2, N2)
    assert jnp.allclose(y2, y2_ref, atol=3e-3, rtol=3e-3)

    # --- 3) multi-block grid (2 N-blocks, 2 K-blocks): accumulation + bias fold
    M3, D3, N3 = 64, 1024, 512
    w3 = jax.random.uniform(kw3, (N3, D3), jnp.float32, -initrange, initrange)
    b3 = 0.01 * jax.random.normal(kb3, (N3,), jnp.float32)
    x3 = jax.random.normal(kx3, (M3, D3), jnp.float32)

    layer3 = HashedFCPallas(w3, b3, compute_dtype=jnp.bfloat16,
                            single_block_max_bytes=0)
    y3 = jax.block_until_ready(layer3(x3))
    x3r = x3.astype(jnp.bfloat16).astype(jnp.float32)
    w3r = w3.astype(jnp.bfloat16).astype(jnp.float32)
    y3_ref = jnp.dot(x3r, w3r.T, precision=lax.Precision.HIGHEST) + b3
    assert y3.shape == (M3, N3)
    assert jnp.allclose(y3, y3_ref, atol=5e-3, rtol=5e-3)

    print("KERNEL_OK")
</pallas_src>

<mosaic_0001>
module attributes {stable_mosaic.version = 11 : i64} {
  func.func @_single_block_kernel(%arg0: memref<8x256xf32, #tpu.memory_space<vmem>>, %arg1: memref<256x128xf32, #tpu.memory_space<vmem>>, %arg2: memref<1x128xf32, #tpu.memory_space<vmem>>, %arg3: memref<8x128xf32, #tpu.memory_space<vmem>>) attributes {dimension_semantics = [], scalar_prefetch = 0 : i64, scratch_operands = 0 : i64, tpu.core_type = #tpu.core_type<tc>} {
    %c0 = arith.constant 0 : index
    %c0_0 = arith.constant 0 : index
    %0 = vector.load %arg0[%c0, %c0_0] : memref<8x256xf32, #tpu.memory_space<vmem>>, vector<8x256xf32>
    %c0_1 = arith.constant 0 : index
    %c0_2 = arith.constant 0 : index
    %1 = vector.load %arg1[%c0_1, %c0_2] : memref<256x128xf32, #tpu.memory_space<vmem>>, vector<256x128xf32>
    %cst = arith.constant dense<0.000000e+00> : vector<8x128xf32>
    %2 = tpu.matmul %0, %1, %cst {dimension_numbers = #tpu.dot_dimension_numbers<[1], [0], [0], [1], [0, 0, 1, 1], [], []>} : vector<8x256xf32>, vector<256x128xf32>, vector<8x128xf32> -> vector<8x128xf32>
    %c0_3 = arith.constant 0 : index
    %c0_4 = arith.constant 0 : index
    %3 = vector.load %arg2[%c0_3, %c0_4] : memref<1x128xf32, #tpu.memory_space<vmem>>, vector<1x128xf32>
    %4 = vector.broadcast %3 : vector<1x128xf32> to vector<8x128xf32>
    %5 = arith.addf %2, %4 : vector<8x128xf32>
    %c0_5 = arith.constant 0 : index
    %c0_6 = arith.constant 0 : index
    %6 = vector.load %arg3[%c0_5, %c0_6] : memref<8x128xf32, #tpu.memory_space<vmem>>, vector<8x128xf32>
    tpu.vector_store %arg3[%c0_5, %c0_6], %5 {strides = array<i32>} : memref<8x128xf32, #tpu.memory_space<vmem>>, vector<8x128xf32>,
    return
  }
}

</mosaic_0001>

<llo_original>
// kernel: tpu_custom_call.1
$region0: #{tpu_custom_call.1}
  #allocation0 [shape = 'u32[]', space=smem, size = 0x4, offset = 0x4, fixed_abs, tag = 'smem constant byte address 0x4 - core index']
  #allocation1 [shape = 'u32[72,128]{1,0:T(1,128)}', space=vmem, size = 0x9000, scoped, tag = 'internal scratch']
  %s0 = inlined_call_operand.hbm [shape: f32[8,256], index: 0, kind: input, shape index: {}]
  %s1 = inlined_call_operand.hbm [shape: f32[256,128], index: 1, kind: input, shape index: {}]
  %s2 = inlined_call_operand.vmem [shape: f32[1,128], index: 2, kind: input, shape index: {}]
  %s3 = inlined_call_operand.hbm [shape: f32[8,128], index: 3, kind: output, shape index: {}]
  %s4 = sld [smem:[#allocation0]]
  $region30: #{tpu_custom_call.1} parent=0
    _
  %s6 = ssub.s32 1, %s4
  %s7 = scalar_select 0, %s6, %s4
  $region1: #{tpu_custom_call.1} parent=0
    #allocation2 [shape = 'u8[8192]{0}', space=vmem, size = 0x2000, scoped, tag = 'input window, operand 0, single buffered']
    #allocation3 [shape = 's32[1]{0}', space=sflag, size = 0x4, scoped, tag = 'scoped memory for tpu_custom_call.1']
    #allocation4 [shape = 's32[1]{0}', space=sflag, size = 0x4, scoped, tag = 'scoped memory for tpu_custom_call.1']
    #allocation5 [shape = 'u8[131072]{0}', space=vmem, size = 0x20000, scoped, tag = 'input window, operand 1, single buffered']
    #allocation6 [shape = 's32[1]{0}', space=sflag, size = 0x4, scoped, tag = 'scoped memory for tpu_custom_call.1']
    #allocation7 [shape = 'u8[4096]{0}', space=vmem, size = 0x1000, scoped, tag = 'output window, operand 0, single buffered']
    %8 = vsyncpa [#allocation3], 0
    %9 = vsyncpa [#allocation6], 0
    %10 = vsyncpa [#allocation4], 0
    // Predicated region
    $region2: #{tpu_custom_call.1} parent=1 // pred_check
      _
    $region3: #{tpu_custom_call.1} parent=1 // pred_check_branch
      %12 = sbr.rel (0) target = $region5
    $region4: #{tpu_custom_call.1} parent=1 // pred_region
      %14 = vsyncadd [#allocation3], 0
      %s16 = sshll.u32 %s0, 4
      %s17 = int_to_ptr.hbm [resolvable:$true] %s16
      %s18 = sshll.u32 [#allocation2], 4
      %s19 = int_to_ptr.vmem [resolvable:$true] %s18
      %21 = dma.hbm_to_vmem [thread:$0]  %s17, 256, %s19, [#allocation3]
    $region5: #{tpu_custom_call.1} parent=1 // pred_fallthru
      _
    // Predicated region
    $region6: #{tpu_custom_call.1} parent=1 // pred_check
      _
    $region7: #{tpu_custom_call.1} parent=1 // pred_check_branch
      %23 = sbr.rel (0) target = $region9
    $region8: #{tpu_custom_call.1} parent=1 // pred_region
      %25 = vsyncadd [#allocation6], 0
      %s26 = sshll.u32 %s1, 4
      %s27 = int_to_ptr.hbm [resolvable:$true] %s26
      %s28 = sshll.u32 [#allocation5], 4
      %s29 = int_to_ptr.vmem [resolvable:$true] %s28
      %34 = dma.hbm_to_vmem [thread:$0]  %s27, 4096, %s29, [#allocation6], 128, 128, 8
    $region9: #{tpu_custom_call.1} parent=1 // pred_fallthru
      _
    // Predicated region
    $region10: #{tpu_custom_call.1} parent=1 // pred_check
      _
    $region11: #{tpu_custom_call.1} parent=1 // pred_check_branch
      %36 = sbr.rel (0) target = $region13
    $region12: #{tpu_custom_call.1} parent=1 // pred_region
      _
    $region13: #{tpu_custom_call.1} parent=1 // pred_fallthru
      _
    // Predicated region
    $region14: #{tpu_custom_call.1} parent=1 // pred_check
      _
    $region15: #{tpu_custom_call.1} parent=1 // pred_check_branch
      %38 = sbr.rel (0) target = $region17
    $region16: #{tpu_custom_call.1} parent=1 // pred_region
      %40 = dma.done [#allocation3], 256
    $region17: #{tpu_custom_call.1} parent=1 // pred_fallthru
      _
    // Predicated region
    $region18: #{tpu_custom_call.1} parent=1 // pred_check
      _
    $region19: #{tpu_custom_call.1} parent=1 // pred_check_branch
      %42 = sbr.rel (0) target = $region21
    $region20: #{tpu_custom_call.1} parent=1 // pred_region
      %44 = dma.done [#allocation6], 4096
    $region21: #{tpu_custom_call.1} parent=1 // pred_fallthru
      _
    %v45 = vld [vmem:[#allocation2] sm:$0xff]
    %v46 = vld [vmem:[#allocation2 + $0x8] sm:$0xff]
    %v47 = vld [vmem:[#allocation5] sm:$0xff]
    %v48 = vld [vmem:[#allocation5 + $0x8] sm:$0xff]
    %v49 = vld [vmem:[#allocation5 + $0x10] sm:$0xff]
    %v50 = vld [vmem:[#allocation5 + $0x18] sm:$0xff]
    %v51 = vld [vmem:[#allocation5 + $0x20] sm:$0xff]
    %v52 = vld [vmem:[#allocation5 + $0x28] sm:$0xff]
    %v53 = vld [vmem:[#allocation5 + $0x30] sm:$0xff]
    %v54 = vld [vmem:[#allocation5 + $0x38] sm:$0xff]
    %v55 = vld [vmem:[#allocation5 + $0x40] sm:$0xff]
    %v56 = vld [vmem:[#allocation5 + $0x48] sm:$0xff]
    %v57 = vld [vmem:[#allocation5 + $0x50] sm:$0xff]
    %v58 = vld [vmem:[#allocation5 + $0x58] sm:$0xff]
    %v59 = vld [vmem:[#allocation5 + $0x60] sm:$0xff]
    %v60 = vld [vmem:[#allocation5 + $0x68] sm:$0xff]
    %v61 = vld [vmem:[#allocation5 + $0x70] sm:$0xff]
    %v62 = vld [vmem:[#allocation5 + $0x78] sm:$0xff]
    %v63 = vld [vmem:[#allocation5 + $0x80] sm:$0xff]
    %v64 = vld [vmem:[#allocation5 + $0x88] sm:$0xff]
    %v65 = vld [vmem:[#allocation5 + $0x90] sm:$0xff]
    %v66 = vld [vmem:[#allocation5 + $0x98] sm:$0xff]
    %v67 = vld [vmem:[#allocation5 + $0xa0] sm:$0xff]
    %v68 = vld [vmem:[#allocation5 + $0xa8] sm:$0xff]
    %v69 = vld [vmem:[#allocation5 + $0xb0] sm:$0xff]
    %v70 = vld [vmem:[#allocation5 + $0xb8] sm:$0xff]
    %v71 = vld [vmem:[#allocation5 + $0xc0] sm:$0xff]
    %v72 = vld [vmem:[#allocation5 + $0xc8] sm:$0xff]
    %v73 = vld [vmem:[#allocation5 + $0xd0] sm:$0xff]
    %v74 = vld [vmem:[#allocation5 + $0xd8] sm:$0xff]
    %v75 = vld [vmem:[#allocation5 + $0xe0] sm:$0xff]
    %v76 = vld [vmem:[#allocation5 + $0xe8] sm:$0xff]
    %v77 = vld [vmem:[#allocation5 + $0xf0] sm:$0xff]
    %v78 = vld [vmem:[#allocation5 + $0xf8] sm:$0xff]
    %v79 = vld [vmem:[%s2] sm:$0x1]
    %v81 = vperm.slane %v79, 0
    %83 = vmatpush.msra.mxu0 %v62
    %84 = vmatpush.msra.mxu0 %v61
    %85 = vmatpush.msra.mxu0 %v60
    %86 = vmatpush.msra.mxu0 %v59
    %87 = vmatpush.msra.mxu0 %v58
    %88 = vmatpush.msra.mxu0 %v57
    %89 = vmatpush.msra.mxu0 %v56
    %90 = vmatpush.msra.mxu0 %v55
    %91 = vmatpush.msra.mxu0 %v54
    %92 = vmatpush.msra.mxu0 %v53
    %93 = vmatpush.msra.mxu0 %v52
    %94 = vmatpush.msra.mxu0 %v51
    %95 = vmatpush.msra.mxu0 %v50
    %96 = vmatpush.msra.mxu0 %v49
    %97 = vmatpush.msra.mxu0 %v48
    %98 = vmatpush.msra.mxu0 %v47
    %99 = vmatmul.f32.gmra.mxu0 %v45
    %v100 = vpop.f32.mrf.mxu0
    %v101 = vadd.f32 %v81, %v100
    %102 = vdwg.mxu0
    %103 = vmatpush.msra.mxu0 %v78
    %104 = vmatpush.msra.mxu0 %v77
    %105 = vmatpush.msra.mxu0 %v76
    %106 = vmatpush.msra.mxu0 %v75
    %107 = vmatpush.msra.mxu0 %v74
    %108 = vmatpush.msra.mxu0 %v73
    %109 = vmatpush.msra.mxu0 %v72
    %110 = vmatpush.msra.mxu0 %v71
    %111 = vmatpush.msra.mxu0 %v70
    %112 = vmatpush.msra.mxu0 %v69
    %113 = vmatpush.msra.mxu0 %v68
    %114 = vmatpush.msra.mxu0 %v67
    %115 = vmatpush.msra.mxu0 %v66
    %116 = vmatpush.msra.mxu0 %v65
    %117 = vmatpush.msra.mxu0 %v64
    %118 = vmatpush.msra.mxu0 %v63
    %119 = vmatmul.f32.gmra.mxu0 %v46
    %v120 = vpop.f32.mrf.mxu0
    %v121 = vadd.f32 %v101, %v120
    %122 = vdwg.mxu0
    %123 = vst [vmem:[#allocation7] sm:$0xff] %v121
    // Predicated region
    $region22: #{tpu_custom_call.1} parent=1 // pred_check
      _
    $region23: #{tpu_custom_call.1} parent=1 // pred_check_branch
      %125 = sbr.rel (0) target = $region25
    $region24: #{tpu_custom_call.1} parent=1 // pred_region
      %127 = vsyncadd [#allocation4], 0
      %s129 = sshll.u32 [#allocation7], 4
      %s130 = int_to_ptr.vmem [resolvable:$true] %s129
      %s131 = sshll.u32 %s3, 4
      %s132 = int_to_ptr.hbm [resolvable:$true] %s131
      %134 = dma.vmem_to_hbm [thread:$0]  %s130, 128, %s132, [#allocation4]
    $region25: #{tpu_custom_call.1} parent=1 // pred_fallthru
      _
    // Predicated region
    $region26: #{tpu_custom_call.1} parent=1 // pred_check
      _
    $region27: #{tpu_custom_call.1} parent=1 // pred_check_branch
      %136 = sbr.rel (0) target = $region29
    $region28: #{tpu_custom_call.1} parent=1 // pred_region
      %138 = dma.done [#allocation4], 128
    $region29: #{tpu_custom_call.1} parent=1 // pred_fallthru
      _
    %139 = vsyncpa [#allocation3], 1
    %140 = vsyncpa [#allocation6], 1
    %141 = vsyncpa [#allocation4], 1

</llo_original>
